<compile_context>
chip_gen: v7x
topology: tpu7x:2x2x1
jax: 0.10.0
libtpu: 0.0.40
codegen_flags: <defaults>
</compile_context>

<pallas_src>
import jax
import jax.numpy as jnp
from jax.experimental import pallas as pl
from jax.experimental.pallas import tpu as pltpu


def _make_kernel(b_tile, hw_tile, hw_total, inv_hw, needs_mask):
    def kernel(x_ref, w1_ref, w2_ref, out_ref, sum_acc, max_acc):
        # x_ref  : (b_tile, C, hw_tile) current HW tile (VMEM, auto-pipelined)
        # w1_ref : (C, hidden)   fc1 weight, (in, out) layout, VMEM-resident
        # w2_ref : (hidden, C)   fc2 weight, (in, out) layout, VMEM-resident
        # out_ref: (b_tile, 1, C) sigmoid gate (written only on the last HW tile)
        # sum_acc/max_acc: (b_tile, C) f32 running accumulators (tiny)
        k = pl.program_id(1)
        nk = pl.num_programs(1)

        @pl.when(k == 0)
        def _init():
            sum_acc[...] = jnp.zeros_like(sum_acc)
            max_acc[...] = jnp.full_like(max_acc, -jnp.inf)

        # Per-tile upcast (bf16 inputs upcast tile-by-tile; no-op for f32).
        x = x_ref[...].astype(jnp.float32)          # (bt, C, hw_t)

        def accumulate(xv):
            # Per-tile cross-lane (XLU) reduce -> tiny (bt, C) accumulators.
            sum_acc[...] = sum_acc[...] + jnp.sum(xv, axis=-1)
            max_acc[...] = jnp.maximum(max_acc[...], jnp.max(xv, axis=-1))

        if needs_mask:
            # Hot path: no masking for every tile but the last one.
            @pl.when(k < nk - 1)
            def _body():
                accumulate(x)

            # Only the last HW tile hangs past the end of the array.
            @pl.when(k == nk - 1)
            def _tail():
                pos = (jax.lax.broadcasted_iota(jnp.int32, x.shape, 2)
                       + k * hw_tile)
                valid = pos < hw_total
                sum_acc[...] = sum_acc[...] + jnp.sum(
                    jnp.where(valid, x, 0.0), axis=-1)
                max_acc[...] = jnp.maximum(
                    max_acc[...],
                    jnp.max(jnp.where(valid, x, -jnp.inf), axis=-1))
        else:
            accumulate(x)

        @pl.when(k == nk - 1)
        def _finalize():
            avg = sum_acc[...] * inv_hw                    # (bt, C)
            mx = max_acc[...]                              # (bt, C)

            w1 = w1_ref[...].astype(jnp.float32)           # (C, hidden)
            w2 = w2_ref[...].astype(jnp.float32)           # (hidden, C)

            # Fuse the two MLP passes: one fc1->ReLU->fc2 on stacked [avg; max].
            pooled = jnp.concatenate([avg, mx], axis=0)    # (2*bt, C)
            h = jnp.maximum(
                jnp.dot(pooled, w1, preferred_element_type=jnp.float32), 0.0)
            o = jnp.dot(h, w2, preferred_element_type=jnp.float32)
            gate = jax.nn.sigmoid(o[:b_tile] + o[b_tile:])  # (bt, C)
            out_ref[...] = gate[:, None, :].astype(out_ref.dtype)

    return kernel


def _auto_hw_tile(HW, bt, C, itemsize, budget, n_buf):
    """Pick the HW tile: whole HW if it fits, else the largest 128-multiple
    within the VMEM budget (floor ~512 f32 / 1024 bf16), preferring an exact
    divisor of HW so the tail-mask branch vanishes."""
    reserve = 4 << 20                       # weights + tiny scratch + slack
    denom = max(1, n_buf * bt * C * itemsize)
    hw_cap = max(128, (budget - reserve) // denom)
    if HW <= hw_cap:
        return HW                           # single reduction step, no mask
    min_tile = 512 if itemsize >= 4 else 1024
    hw_t = max(min_tile, (hw_cap // 128) * 128)
    hw_t = min(hw_t, (HW // 128) * 128)
    hw_t = max(hw_t, 128)
    floor = min(min_tile, hw_t)
    cand = hw_t
    while cand >= floor:
        if HW % cand == 0:                  # divisor -> no tail mask at all
            return cand
        cand -= 128
    return hw_t                             # keep the big tile; tail is masked


def channel_attention(x, fc1_w, fc2_w, *, hw_tile=None):
    """ChannelAttention forward.

    x: (B, C, H, W); fc1_w: (C//r, C, 1, 1); fc2_w: (C, C//r, 1, 1).
    Returns the sigmoid gate of shape (B, C, 1, 1), matching the PyTorch module.
    """
    B, C, H, W = x.shape
    assert jnp.issubdtype(x.dtype, jnp.floating), (
        "floating-point input required (-inf init for the max pool)")
    hidden = fc1_w.shape[0]
    HW = H * W

    x_flat = x.reshape(B, C, HW)
    w1_t = fc1_w.reshape(hidden, C).T   # (C, hidden)
    w2_t = fc2_w.reshape(C, hidden).T   # (hidden, C)

    # Batch tile: 8 (sublane-aligned) for big batches; otherwise split B in two
    # so the "parallel" grid axis has >= 2 rows and v7x's second TensorCore
    # gets work (no-op on single-core v5e/v6e).
    if B > 8:
        bt = 8
    elif B >= 2:
        bt = pl.cdiv(B, 2)
    else:
        bt = 1

    # Generation-aware VMEM budget: ~75% of physical per-core VMEM
    # (~96 MiB on v5e/v6e with 128 MiB, ~48 MiB on v7x with 64 MiB).
    try:
        vmem_cap = pltpu.get_tpu_info().vmem_capacity_bytes
    except Exception:
        vmem_cap = 64 * 1024 * 1024
    budget = int(vmem_cap) * 3 // 4

    itemsize = jnp.dtype(x.dtype).itemsize
    n_buf = 3   # pipeline depth assumed for sizing (input triple-buffered when tiled)

    if hw_tile is not None:
        # Validate/round user-supplied tiles to the 128-lane constraint.
        rounded = max(128, (int(hw_tile) // 128) * 128)
        hw_t = HW if rounded >= HW else rounded
    else:
        hw_t = _auto_hw_tile(HW, bt, C, itemsize, budget, n_buf)

    nb = pl.cdiv(B, bt)
    nk = pl.cdiv(HW, hw_t)
    needs_mask = (HW % hw_t) != 0
    inv_hw = 1.0 / float(HW)

    kernel = _make_kernel(bt, hw_t, HW, inv_hw, needs_mask)

    # x tile streams over the HW (reduction) axis; deepen the pipeline when
    # there are enough reduction steps to benefit.
    if nk >= 3:
        try:
            x_spec = pl.BlockSpec((bt, C, hw_t), lambda b, k: (b, 0, k),
                                  pipeline_mode=pl.Buffered(3))
        except TypeError:
            x_spec = pl.BlockSpec((bt, C, hw_t), lambda b, k: (b, 0, k))
    else:
        x_spec = pl.BlockSpec((bt, C, hw_t), lambda b, k: (b, 0, k))

    grid_spec = pltpu.PrefetchScalarGridSpec(
        num_scalar_prefetch=0,
        grid=(nb, nk),
        in_specs=[
            x_spec,
            # Weights: constant block index -> fetched once, VMEM-resident.
            pl.BlockSpec((C, hidden), lambda b, k: (0, 0)),
            pl.BlockSpec((hidden, C), lambda b, k: (0, 0)),
        ],
        out_specs=pl.BlockSpec((bt, 1, C), lambda b, k: (b, 0, 0)),
        scratch_shapes=[
            pltpu.VMEM((bt, C), jnp.float32),   # running sum  (tiny)
            pltpu.VMEM((bt, C), jnp.float32),   # running max  (tiny)
        ],
    )

    # Actual VMEM need: pipelined x blocks + resident weights + tiny scratch/out.
    w_itemsize = jnp.dtype(w1_t.dtype).itemsize
    x_block_bytes = bt * C * hw_t * itemsize
    need = (n_buf * x_block_bytes
            + 2 * 2 * C * hidden * w_itemsize
            + 2 * bt * C * 4
            + 2 * bt * C * itemsize
            + (2 << 20))
    vmem_limit = int(min(budget, max(need, 16 << 20)))

    # Memory-bound streaming op: tell XLA's scheduler.
    cost = pl.CostEstimate(
        flops=2 * B * C * HW + 8 * B * C * hidden,
        transcendentals=2 * B * C,
        bytes_accessed=(B * C * HW * itemsize
                        + 2 * C * hidden * w_itemsize
                        + B * C * itemsize),
    )

    out = pl.pallas_call(
        kernel,
        out_shape=jax.ShapeDtypeStruct((B, 1, C), x.dtype),
        grid_spec=grid_spec,
        compiler_params=pltpu.CompilerParams(
            dimension_semantics=("parallel", "arbitrary"),
            vmem_limit_bytes=vmem_limit,
        ),
        cost_estimate=cost,
    )(x_flat, w1_t, w2_t)

    return out.reshape(B, C, 1, 1)


def channel_attention_ref(x, fc1_w, fc2_w):
    """Pure-JAX reference matching the PyTorch forward."""
    B, C, H, W = x.shape
    hidden = fc1_w.shape[0]
    w1 = fc1_w.reshape(hidden, C)
    w2 = fc2_w.reshape(C, hidden)
    avg = jnp.mean(x, axis=(2, 3))  # (B, C)
    mx = jnp.max(x, axis=(2, 3))    # (B, C)

    def mlp(v):
        return jnp.maximum(v @ w1.T, 0.0) @ w2.T

    return jax.nn.sigmoid(mlp(avg) + mlp(mx)).reshape(B, C, 1, 1)


if __name__ == "__main__":
    # in_planes must be divisible by ratio=16 -> C=32, hidden=2.
    B, C, H, W = 2, 32, 16, 16
    ratio = 16
    hidden = C // ratio

    key = jax.random.PRNGKey(0)
    kx, kx2, k1, k2 = jax.random.split(key, 4)
    x = jax.random.normal(kx, (B, C, H, W), dtype=jnp.float32)
    fc1_w = jax.random.normal(k1, (hidden, C, 1, 1), dtype=jnp.float32) * 0.1
    fc2_w = jax.random.normal(k2, (C, hidden, 1, 1), dtype=jnp.float32) * 0.1

    # 1) Default path (single HW tile at this toy size; nb=2 -> megacore-ready).
    out = jax.block_until_ready(channel_attention(x, fc1_w, fc2_w))
    ref = channel_attention_ref(x, fc1_w, fc2_w)
    assert out.shape == (B, C, 1, 1)
    assert jnp.allclose(out, ref, atol=1e-5, rtol=1e-5), "mismatch vs reference"

    # 2) Force the streaming / tail-masking / triple-buffered path:
    #    HW=400 with 128-wide tiles -> 4 reduction steps, last one masked.
    H2 = W2 = 20
    x2 = jax.random.normal(kx2, (B, C, H2, W2), dtype=jnp.float32)
    out2 = jax.block_until_ready(
        channel_attention(x2, fc1_w, fc2_w, hw_tile=128))
    ref2 = channel_attention_ref(x2, fc1_w, fc2_w)
    assert jnp.allclose(out2, ref2, atol=1e-5, rtol=1e-5), "tiled mismatch"

    print("KERNEL_OK")
</pallas_src>

<mosaic_0001>
module attributes {stable_mosaic.version = 11 : i64} {
  func.func @kernel(%arg0: i32, %arg1: i32, %arg2: memref<1x32x256xf32, #tpu.memory_space<vmem>>, %arg3: memref<32x2xf32, #tpu.memory_space<vmem>>, %arg4: memref<2x32xf32, #tpu.memory_space<vmem>>, %arg5: memref<1x1x32xf32, #tpu.memory_space<vmem>>, %arg6: memref<1x32xf32, #tpu.memory_space<vmem>>, %arg7: memref<1x32xf32, #tpu.memory_space<vmem>>) attributes {dimension_semantics = [#tpu.dimension_semantics<parallel>, #tpu.dimension_semantics<arbitrary>], iteration_bounds = array<i64: 2, 1>, scalar_prefetch = 0 : i64, scratch_operands = 2 : i64, tpu.core_type = #tpu.core_type<tc>, window_params = [{transform_indices = @transform_0, window_bounds = array<i64: 1, 32, 256>}, {pipeline_mode = #tpu.pipeline_mode<synchronous>, transform_indices = @transform_1, window_bounds = array<i64: 32, 2>}, {pipeline_mode = #tpu.pipeline_mode<synchronous>, transform_indices = @transform_2, window_bounds = array<i64: 2, 32>}, {transform_indices = @transform_3, window_bounds = array<i64: 1, 1, 32>}]} {
    %c0_i32 = arith.constant 0 : i32
    %0 = arith.cmpi eq, %arg1, %c0_i32 : i32
    %1 = arith.extui %0 : i1 to i32
    %c0_i32_0 = arith.constant 0 : i32
    %2 = arith.cmpi ne, %1, %c0_i32_0 : i32
    scf.if %2 {
      %cst_14 = arith.constant 0.000000e+00 : f32
      %15 = vector.broadcast %cst_14 : f32 to vector<1x32xf32>
      %c0_15 = arith.constant 0 : index
      %c0_16 = arith.constant 0 : index
      %16 = vector.load %arg6[%c0_15, %c0_16] : memref<1x32xf32, #tpu.memory_space<vmem>>, vector<1x32xf32>
      tpu.vector_store %arg6[%c0_15, %c0_16], %15 {strides = array<i32>} : memref<1x32xf32, #tpu.memory_space<vmem>>, vector<1x32xf32>,
      %cst_17 = arith.constant 0xFF800000 : f32
      %17 = vector.broadcast %cst_17 : f32 to vector<1x32xf32>
      %c0_18 = arith.constant 0 : index
      %c0_19 = arith.constant 0 : index
      %18 = vector.load %arg7[%c0_18, %c0_19] : memref<1x32xf32, #tpu.memory_space<vmem>>, vector<1x32xf32>
      tpu.vector_store %arg7[%c0_18, %c0_19], %17 {strides = array<i32>} : memref<1x32xf32, #tpu.memory_space<vmem>>, vector<1x32xf32>,
    } else {
    }
    %c0 = arith.constant 0 : index
    %c0_1 = arith.constant 0 : index
    %c0_2 = arith.constant 0 : index
    %3 = vector.load %arg2[%c0, %c0_1, %c0_2] : memref<1x32x256xf32, #tpu.memory_space<vmem>>, vector<1x32x256xf32>
    %c0_3 = arith.constant 0 : index
    %c0_4 = arith.constant 0 : index
    %4 = vector.load %arg6[%c0_3, %c0_4] : memref<1x32xf32, #tpu.memory_space<vmem>>, vector<1x32xf32>
    %cst = arith.constant dense<0.000000e+00> : vector<1x32xf32>
    %5 = vector.multi_reduction <add>, %3, %cst [2] : vector<1x32x256xf32> to vector<1x32xf32>
    %6 = arith.addf %4, %5 : vector<1x32xf32>
    %c0_5 = arith.constant 0 : index
    %c0_6 = arith.constant 0 : index
    %7 = vector.load %arg6[%c0_5, %c0_6] : memref<1x32xf32, #tpu.memory_space<vmem>>, vector<1x32xf32>
    tpu.vector_store %arg6[%c0_5, %c0_6], %6 {strides = array<i32>} : memref<1x32xf32, #tpu.memory_space<vmem>>, vector<1x32xf32>,
    %c0_7 = arith.constant 0 : index
    %c0_8 = arith.constant 0 : index
    %8 = vector.load %arg7[%c0_7, %c0_8] : memref<1x32xf32, #tpu.memory_space<vmem>>, vector<1x32xf32>
    %cst_9 = arith.constant dense<0xFF800000> : vector<1x32xf32>
    %9 = vector.multi_reduction <maximumf>, %3, %cst_9 [2] : vector<1x32x256xf32> to vector<1x32xf32>
    %10 = arith.maximumf %8, %9 : vector<1x32xf32>
    %c0_10 = arith.constant 0 : index
    %c0_11 = arith.constant 0 : index
    %11 = vector.load %arg7[%c0_10, %c0_11] : memref<1x32xf32, #tpu.memory_space<vmem>>, vector<1x32xf32>
    tpu.vector_store %arg7[%c0_10, %c0_11], %10 {strides = array<i32>} : memref<1x32xf32, #tpu.memory_space<vmem>>, vector<1x32xf32>,
    %c0_i32_12 = arith.constant 0 : i32
    %12 = arith.cmpi eq, %arg1, %c0_i32_12 : i32
    %13 = arith.extui %12 : i1 to i32
    %c0_i32_13 = arith.constant 0 : i32
    %14 = arith.cmpi ne, %13, %c0_i32_13 : i32
    scf.if %14 {
      %c0_14 = arith.constant 0 : index
      %c0_15 = arith.constant 0 : index
      %15 = vector.load %arg6[%c0_14, %c0_15] : memref<1x32xf32, #tpu.memory_space<vmem>>, vector<1x32xf32>
      %cst_16 = arith.constant 3.906250e-03 : f32
      %16 = vector.broadcast %cst_16 : f32 to vector<1x32xf32>
      %17 = arith.mulf %15, %16 : vector<1x32xf32>
      %c0_17 = arith.constant 0 : index
      %c0_18 = arith.constant 0 : index
      %18 = vector.load %arg7[%c0_17, %c0_18] : memref<1x32xf32, #tpu.memory_space<vmem>>, vector<1x32xf32>
      %c0_19 = arith.constant 0 : index
      %c0_20 = arith.constant 0 : index
      %19 = vector.load %arg3[%c0_19, %c0_20] : memref<32x2xf32, #tpu.memory_space<vmem>>, vector<32x2xf32>
      %c0_21 = arith.constant 0 : index
      %c0_22 = arith.constant 0 : index
      %20 = vector.load %arg4[%c0_21, %c0_22] : memref<2x32xf32, #tpu.memory_space<vmem>>, vector<2x32xf32>
      %21 = tpu.concatenate %17, %18 in 0 : vector<1x32xf32>, vector<1x32xf32> -> vector<2x32xf32>
      %cst_23 = arith.constant dense<0.000000e+00> : vector<2x2xf32>
      %22 = tpu.matmul %21, %19, %cst_23 {dimension_numbers = #tpu.dot_dimension_numbers<[1], [0], [0], [1], [0, 0, 1, 1], [], []>} : vector<2x32xf32>, vector<32x2xf32>, vector<2x2xf32> -> vector<2x2xf32>
      %cst_24 = arith.constant 0.000000e+00 : f32
      %23 = vector.broadcast %cst_24 : f32 to vector<2x2xf32>
      %24 = arith.maximumf %22, %23 : vector<2x2xf32>
      %cst_25 = arith.constant dense<0.000000e+00> : vector<2x32xf32>
      %25 = tpu.matmul %24, %20, %cst_25 {dimension_numbers = #tpu.dot_dimension_numbers<[1], [0], [0], [1], [0, 0, 1, 1], [], []>} : vector<2x2xf32>, vector<2x32xf32>, vector<2x32xf32> -> vector<2x32xf32>
      %26 = vector.extract_strided_slice %25 {offsets = [0, 0], sizes = [1, 32], strides = [1, 1]} : vector<2x32xf32> to vector<1x32xf32>
      %27 = vector.extract_strided_slice %25 {offsets = [1, 0], sizes = [1, 32], strides = [1, 1]} : vector<2x32xf32> to vector<1x32xf32>
      %28 = arith.addf %26, %27 : vector<1x32xf32>
      %29 = arith.negf %28 : vector<1x32xf32>
      %30 = math.exp %29 : vector<1x32xf32>
      %cst_26 = arith.constant 1.000000e+00 : f32
      %31 = vector.broadcast %cst_26 : f32 to vector<1x32xf32>
      %32 = arith.addf %31, %30 : vector<1x32xf32>
      %33 = arith.divf %31, %32 : vector<1x32xf32>
      %34 = vector.shape_cast %33 : vector<1x32xf32> to vector<1x1x32xf32>
      %c0_27 = arith.constant 0 : index
      %c0_28 = arith.constant 0 : index
      %c0_29 = arith.constant 0 : index
      %35 = vector.load %arg5[%c0_27, %c0_28, %c0_29] : memref<1x1x32xf32, #tpu.memory_space<vmem>>, vector<1x1x32xf32>
      tpu.vector_store %arg5[%c0_27, %c0_28, %c0_29], %34 {strides = array<i32>} : memref<1x1x32xf32, #tpu.memory_space<vmem>>, vector<1x1x32xf32>,
    } else {
    }
    return
  }
  func.func @transform_0(%arg0: i32, %arg1: i32) -> (i32, i32, i32) {
    %c0_i32 = arith.constant 0 : i32
    %c0_i32_0 = arith.constant 0 : i32
    return %arg0, %c0_i32, %arg1 : i32, i32, i32
  }
  func.func @transform_1(%arg0: i32, %arg1: i32) -> (i32, i32) {
    %c0_i32 = arith.constant 0 : i32
    %c0_i32_0 = arith.constant 0 : i32
    %c0_i32_1 = arith.constant 0 : i32
    return %c0_i32, %c0_i32_0 : i32, i32
  }
  func.func @transform_2(%arg0: i32, %arg1: i32) -> (i32, i32) {
    %c0_i32 = arith.constant 0 : i32
    %c0_i32_0 = arith.constant 0 : i32
    %c0_i32_1 = arith.constant 0 : i32
    return %c0_i32, %c0_i32_0 : i32, i32
  }
  func.func @transform_3(%arg0: i32, %arg1: i32) -> (i32, i32, i32) {
    %c0_i32 = arith.constant 0 : i32
    %c0_i32_0 = arith.constant 0 : i32
    %c0_i32_1 = arith.constant 0 : i32
    return %arg0, %c0_i32, %c0_i32_0 : i32, i32, i32
  }
}

</mosaic_0001>

<llo_original>
// kernel: tpu_custom_call.1
$region0: #{tpu_custom_call.1}
  #allocation0 [shape = 'u32[]', space=smem, size = 0x4, offset = 0x4, fixed_abs, tag = 'smem constant byte address 0x4 - core index']
  #allocation1 [shape = 'u32[144,128]{1,0:T(1,128)}', space=vmem, size = 0x12000, scoped, tag = 'internal scratch']
  #allocation2 [shape = 'f32[1,32]{1,0:T(1,128)}', space=vmem, size = 0x200, scoped, tag = 'scratch operand']
  #allocation3 [shape = 'f32[1,32]{1,0:T(1,128)}', space=vmem, size = 0x200, scoped, tag = 'scratch operand']
  %s0 = inlined_call_operand.hbm [shape: f32[2,32,256], index: 0, kind: input, shape index: {}]
  %s1 = inlined_call_operand.vmem [shape: f32[32,2], index: 1, kind: input, shape index: {}]
  %s2 = inlined_call_operand.vmem [shape: f32[2,32], index: 2, kind: input, shape index: {}]
  %s3 = inlined_call_operand.hbm [shape: f32[2,1,32], index: 3, kind: output, shape index: {}]
  %s4 = sld [smem:[#allocation0]]
  $region57: #{tpu_custom_call.1} parent=0
    _
  %s6 = ssub.s32 1, %s4
  %s7 = scalar_select 0, %s6, %s4
  $region1: #{tpu_custom_call.1} parent=0
    #allocation4 [shape = 'u8[65536]{0}', space=vmem, size = 0x10000, scoped, tag = 'input window, operand 0']
    #allocation5 [shape = 's32[2]{0}', space=sflag, size = 0x8, scoped, tag = 'scoped memory for tpu_custom_call.1']
    #allocation6 [shape = 's32[2]{0}', space=sflag, size = 0x8, scoped, tag = 'scoped memory for tpu_custom_call.1']
    #allocation7 [shape = 'u8[1024]{0}', space=vmem, size = 0x400, scoped, tag = 'output window, operand 0']
    %8 = vsyncpa [#allocation5], 0
    %s9 = scalar_lea.sflag [#allocation5], 1
    %10 = vsyncpa %s9, 0
    %11 = vsyncpa [#allocation6], 0
    %s12 = scalar_lea.sflag [#allocation6], 1
    %13 = vsyncpa %s12, 0
    loop: start=0, step=1, limit=4
    $region2: #{tpu_custom_call.1} parent=1 // loop_pre_header
      _
    $region3: #{tpu_custom_call.1} parent=1 // loop_header
      %s15 = sphi 0, %s19
      %p16 = scmp.ge.s32.totalorder %s15, 4
      %s22 = sphi 0, %s34
      %s23 = sphi 0, %s30
      %s24 = sphi 0, %s22
      %s25 = sphi 0, %s23
      %s26 = sphi 0, %s24
      %s27 = sphi 0, %s25
      %s39 = sphi 0, %s41
      %s42 = sphi 0, %s39
      %s43 = sphi 0, %s42
      %s59 = sphi 0, %s43
      %s63 = sphi 0, %s63
      %s65 = sphi 0, %s63
      %s66 = sphi 0, %s65
      %s80 = sphi 0, %s66
      %s84 = sphi 0, %s84
      %s86 = sphi 0, %s84
      %s87 = sphi 0, %s86
      %s101 = sphi 0, %s87
      %s107 = sphi 0, %s109
      %s110 = sphi 0, %s107
      %s111 = sphi 0, %s110
      %s127 = sphi 0, %s111
    $region4: #{tpu_custom_call.1} parent=1 // loop_header_branch
      %18 = sbr.rel (%p16) target = $region8
    $region5: #{tpu_custom_call.1} parent=1 // loop_body
      %s20 = ssub.s32 %s15, 1
      %s21 = ssub.s32 %s15, 2
      %s28 = sadd.s32 1, %s23
      %p29 = scmp.ge.s32.totalorder %s28, 1
      %s30 = scalar_select %p29, 0, %s28
      %s31 = sadd.s32 1, %s22
      %s32 = scalar_select %p29, %s31, %s22
      %p33 = scmp.ge.s32.totalorder %s32, 2
      %s34 = scalar_select %p33, 0, %s32
      %s35 = ssub.s32 %s22, %s34
      %s36 = ssub.s32 %s23, %s30
      %s37 = sor.u32 %s35, %s36
      %p38 = scmp.eq.s32.totalorder %s37, 0
      %s40 = sadd.s32 %s39, 1
      %s41 = scalar_select %p38, %s39, %s40
      %p44 = pneg %p38
      %p45 = scmp.eq.s32.totalorder %s15, 1
      %p46 = por %p44, %p45
      %p47 = scmp.ne.s32.totalorder %s39, %s42
      %p48 = scmp.eq.s32.totalorder %s15, 0
      %p49 = por %p47, %p48
      %p50 = scmp.ne.s32.totalorder %s39, %s42
      %p51 = scmp.eq.s32.totalorder %s20, 1
      %p52 = por %p50, %p51
      %p53 = scmp.ne.s32.totalorder %s42, %s43
      %p54 = scmp.eq.s32.totalorder %s20, 0
      %p55 = por %p53, %p54
      %p56 = scmp.ne.s32.totalorder %s42, %s43
      %p57 = scmp.eq.s32.totalorder %s21, 1
      %p58 = por %p56, %p57
      %p60 = scmp.ne.s32.totalorder %s43, %s59
      %p61 = scmp.eq.s32.totalorder %s21, 0
      %p62 = por %p60, %p61
      %s64 = sadd.s32 %s63, 1
      %p67 = scmp.eq.s32.totalorder %s15, 1
      %p68 = scmp.ne.s32.totalorder %s63, %s65
      %p69 = scmp.eq.s32.totalorder %s15, 0
      %p70 = por %p68, %p69
      %p71 = scmp.ne.s32.totalorder %s63, %s65
      %p72 = scmp.eq.s32.totalorder %s20, 1
      %p73 = por %p71, %p72
      %p74 = scmp.ne.s32.totalorder %s65, %s66
      %p75 = scmp.eq.s32.totalorder %s20, 0
      %p76 = por %p74, %p75
      %p77 = scmp.ne.s32.totalorder %s65, %s66
      %p78 = scmp.eq.s32.totalorder %s21, 1
      %p79 = por %p77, %p78
      %p81 = scmp.ne.s32.totalorder %s66, %s80
      %p82 = scmp.eq.s32.totalorder %s21, 0
      %p83 = por %p81, %p82
      %s85 = sadd.s32 %s84, 1
      %p88 = scmp.eq.s32.totalorder %s15, 1
      %p89 = scmp.ne.s32.totalorder %s84, %s86
      %p90 = scmp.eq.s32.totalorder %s15, 0
      %p91 = por %p89, %p90
      %p92 = scmp.ne.s32.totalorder %s84, %s86
      %p93 = scmp.eq.s32.totalorder %s20, 1
      %p94 = por %p92, %p93
      %p95 = scmp.ne.s32.totalorder %s86, %s87
      %p96 = scmp.eq.s32.totalorder %s20, 0
      %p97 = por %p95, %p96
      %p98 = scmp.ne.s32.totalorder %s86, %s87
      %p99 = scmp.eq.s32.totalorder %s21, 1
      %p100 = por %p98, %p99
      %p102 = scmp.ne.s32.totalorder %s87, %s101
      %p103 = scmp.eq.s32.totalorder %s21, 0
      %p104 = por %p102, %p103
      %s105 = ssub.s32 %s22, %s34
      %p106 = scmp.eq.s32.totalorder %s105, 0
      %s108 = sadd.s32 %s107, 1
      %s109 = scalar_select %p106, %s107, %s108
      %p112 = pneg %p106
      %p113 = scmp.eq.s32.totalorder %s15, 1
      %p114 = por %p112, %p113
      %p115 = scmp.ne.s32.totalorder %s107, %s110
      %p116 = scmp.eq.s32.totalorder %s15, 0
      %p117 = por %p115, %p116
      %p118 = scmp.ne.s32.totalorder %s107, %s110
      %p119 = scmp.eq.s32.totalorder %s20, 1
      %p120 = por %p118, %p119
      %p121 = scmp.ne.s32.totalorder %s110, %s111
      %p122 = scmp.eq.s32.totalorder %s20, 0
      %p123 = por %p121, %p122
      %p124 = scmp.ne.s32.totalorder %s110, %s111
      %p125 = scmp.eq.s32.totalorder %s21, 1
      %p126 = por %p124, %p125
      %p128 = scmp.ne.s32.totalorder %s111, %s127
      %p129 = scmp.eq.s32.totalorder %s21, 0
      %p130 = por %p128, %p129
      %p131 = scmp.le.s32.totalorder 1, %s15
      %p132 = scmp.lt.s32.totalorder %s15, 3
      %p133 = pnand %p131, %p132
      %p134 = pneg %p133
      // Predicated region
      $region9: #{tpu_custom_call.1} parent=5 // pred_check
        _
      $region10: #{tpu_custom_call.1} parent=5 // pred_check_branch
        %136 = sbr.rel (%p133) target = $region12
      $region11: #{tpu_custom_call.1} parent=5 // pred_region
        %s137 = ssub.s32 %s15, 1
        // Predicated region
        $region13: #{tpu_custom_call.1} parent=11 // pred_check
          %p138 = pneg %p76
        $region14: #{tpu_custom_call.1} parent=11 // pred_check_branch
          %140 = sbr.rel (%p138) target = $region16
        $region15: #{tpu_custom_call.1} parent=11 // pred_region
          _
        $region16: #{tpu_custom_call.1} parent=11 // pred_fallthru
          _
        // Predicated region
        $region17: #{tpu_custom_call.1} parent=11 // pred_check
          %p141 = pneg %p97
        $region18: #{tpu_custom_call.1} parent=11 // pred_check_branch
          %143 = sbr.rel (%p141) target = $region20
        $region19: #{tpu_custom_call.1} parent=11 // pred_region
          _
        $region20: #{tpu_custom_call.1} parent=11 // pred_fallthru
          _
      $region12: #{tpu_custom_call.1} parent=5 // pred_fallthru
        _
      %p144 = scmp.lt.s32.totalorder %s15, 2
      // Predicated region
      $region21: #{tpu_custom_call.1} parent=5 // pred_check
        %p145 = pneg %p144
      $region22: #{tpu_custom_call.1} parent=5 // pred_check_branch
        %147 = sbr.rel (%p145) target = $region24
      $region23: #{tpu_custom_call.1} parent=5 // pred_region
        // Predicated region
        $region25: #{tpu_custom_call.1} parent=23 // pred_check
          %p148 = pneg %p49
        $region26: #{tpu_custom_call.1} parent=23 // pred_check_branch
          %150 = sbr.rel (%p148) target = $region28
        $region27: #{tpu_custom_call.1} parent=23 // pred_region
          %s151 = sand.u32 %s39, 1
          %s152 = scalar_lea.sflag [#allocation5], %s151
          %s153 = sand.u32 %s39, 1
          %s154 = smul.addr %s153, 64
          %s155 = scalar_lea.vmem [#allocation4], %s154
          %s156 = smul.u32 2, %s23
          %s158 = ssub.s32 1024, 1024
          %159 = vsyncadd %s152, %s158
          %s160 = smul.addr %s22, 8
          %s161 = sadd.s32 %s156, %s160
          %s162 = smul.addr %s161, 128
          %s163 = scalar_lea.hbm %s0, %s162
          %s164 = sshll.u32 %s155, 4
          %s165 = int_to_ptr.vmem [resolvable:$true] %s164
          %170 = dma.hbm_to_vmem [thread:$0]  %s163, 1024, %s165, %s152, 256, 256, 16
        $region28: #{tpu_custom_call.1} parent=23 // pred_fallthru
          _
      $region24: #{tpu_custom_call.1} parent=5 // pred_fallthru
        _
      %p171 = scmp.le.s32.totalorder 1, %s15
      %p172 = scmp.lt.s32.totalorder %s15, 3
      %p173 = pnand %p171, %p172
      %p174 = pneg %p173
      // Predicated region
      $region29: #{tpu_custom_call.1} parent=5 // pred_check
        _
      $region30: #{tpu_custom_call.1} parent=5 // pred_check_branch
        %176 = sbr.rel (%p173) target = $region32
      $region31: #{tpu_custom_call.1} parent=5 // pred_region
        %s177 = ssub.s32 %s15, 1
        %s178 = sand.u32 %s42, 1
        %s179 = scalar_lea.sflag [#allocation5], %s178
        %s180 = sand.u32 %s42, 1
        %s181 = smul.addr %s180, 64
        %s182 = scalar_lea.vmem [#allocation4], %s181
        // Predicated region
        $region33: #{tpu_custom_call.1} parent=31 // pred_check
          %p183 = pneg %p55
        $region34: #{tpu_custom_call.1} parent=31 // pred_check_branch
          %185 = sbr.rel (%p183) target = $region36
        $region35: #{tpu_custom_call.1} parent=31 // pred_region
          %186 = dma.done %s179, 1024
        $region36: #{tpu_custom_call.1} parent=31 // pred_fallthru
          _
        %s187 = sand.u32 %s42, 1
        %s188 = scalar_lea.sflag [#allocation5], %s187
        %s189 = sand.u32 %s42, 1
        %s190 = smul.addr %s189, 64
        %s191 = scalar_lea.vmem [#allocation4], %s190
        %p192 = pneg %p55
        %p193 = pneg %p52
        %p194 = pneg %p76
        %p195 = pneg %p73
        %p196 = pneg %p97
        %p197 = pneg %p94
        %p198 = pneg %p123
        %p199 = pneg %p120
        %s200 = sand.u32 %s110, 1
        %s201 = scalar_lea.sflag [#allocation6], %s200
        %s202 = sand.u32 %s110, 1
        %s203 = scalar_lea.vmem [#allocation7], %s202
        %s204 = smul.u32 2, %s25
        %p205 = scmp.eq.s32.totalorder %s25, 0
        // Predicated region
        $region37: #{tpu_custom_call.1} parent=31 // pred_check
          %p206 = pneg %p205
        $region38: #{tpu_custom_call.1} parent=31 // pred_check_branch
          %208 = sbr.rel (%p206) target = $region40
        $region39: #{tpu_custom_call.1} parent=31 // pred_region
          %vm209 = vcmask 253952
          %210 = vst.msk [vmem:[#allocation2] sm:$0x1] %vm209, 0.0
          %211 = vst.msk [vmem:[#allocation3] sm:$0x1] %vm209, -inf
        $region40: #{tpu_custom_call.1} parent=31 // pred_fallthru
          _
        %v212 = vld [vmem:[%s182] sm:$0xff]
        %v213 = vld [vmem:[%s182 + $0x8] sm:$0xff]
        %v214 = vld [vmem:[%s182 + $0x10] sm:$0xff]
        %v215 = vld [vmem:[%s182 + $0x18] sm:$0xff]
        %v216 = vld [vmem:[%s182 + $0x20] sm:$0xff]
        %v217 = vld [vmem:[%s182 + $0x28] sm:$0xff]
        %v218 = vld [vmem:[%s182 + $0x30] sm:$0xff]
        %v219 = vld [vmem:[%s182 + $0x38] sm:$0xff]
        %v220 = vld [vmem:[#allocation2] sm:$0x1]
        %v221 = vadd.f32 %v212, %v213
        %222 = vadd.xlane.f32.xlu0 %v221
        %v223 = vpop.xlane.xlu0 %222
        %v224 = vadd.f32 %v214, %v215
        %225 = vadd.xlane.f32.xlu0 %v224
        %v226 = vpop.xlane.xlu0 %225
        %v227 = vadd.f32 %v216, %v217
        %228 = vadd.xlane.f32.xlu0 %v227
        %v229 = vpop.xlane.xlu0 %228
        %v230 = vadd.f32 %v218, %v219
        %231 = vadd.xlane.f32.xlu0 %v230
        %v232 = vpop.xlane.xlu0 %231
        %v237 = vlaneseq
        %v238 = vshrl.u32 %v237, 7
        %v239 = vsub.s32 0, %v238
        %v240 = vrot.slane %v223, %v239
        %v241 = vlaneseq
        %v242 = vshrl.u32 %v241, 7
        %v243 = vsub.s32 1, %v242
        %v244 = vrot.slane %v223, %v243
        %v245 = vlaneseq
        %v246 = vshrl.u32 %v245, 7
        %v247 = vsub.s32 2, %v246
        %v248 = vrot.slane %v223, %v247
        %v249 = vlaneseq
        %v250 = vshrl.u32 %v249, 7
        %v251 = vsub.s32 3, %v250
        %v252 = vrot.slane %v223, %v251
        %v253 = vlaneseq
        %v254 = vshrl.u32 %v253, 7
        %v255 = vsub.s32 4, %v254
        %v256 = vrot.slane %v223, %v255
        %v257 = vlaneseq
        %v258 = vshrl.u32 %v257, 7
        %v259 = vsub.s32 5, %v258
        %v260 = vrot.slane %v223, %v259
        %v261 = vlaneseq
        %v262 = vshrl.u32 %v261, 7
        %v263 = vsub.s32 6, %v262
        %v264 = vrot.slane %v223, %v263
        %v265 = vlaneseq
        %v266 = vshrl.u32 %v265, 7
        %v267 = vsub.s32 7, %v266
        %v268 = vrot.slane %v223, %v267
        %v269 = vlaneseq
        %v270 = vshrl.u32 %v269, 7
        %v271 = vsub.s32 0, %v270
        %v272 = vrot.slane %v226, %v271
        %v273 = vlaneseq
        %v274 = vshrl.u32 %v273, 7
        %v275 = vsub.s32 1, %v274
        %v276 = vrot.slane %v226, %v275
        %v277 = vlaneseq
        %v278 = vshrl.u32 %v277, 7
        %v279 = vsub.s32 2, %v278
        %v280 = vrot.slane %v226, %v279
        %v281 = vlaneseq
        %v282 = vshrl.u32 %v281, 7
        %v283 = vsub.s32 3, %v282
        %v284 = vrot.slane %v226, %v283
        %v285 = vlaneseq
        %v286 = vshrl.u32 %v285, 7
        %v287 = vsub.s32 4, %v286
        %v288 = vrot.slane %v226, %v287
        %v289 = vlaneseq
        %v290 = vshrl.u32 %v289, 7
        %v291 = vsub.s32 5, %v290
        %v292 = vrot.slane %v226, %v291
        %v293 = vlaneseq
        %v294 = vshrl.u32 %v293, 7
        %v295 = vsub.s32 6, %v294
        %v296 = vrot.slane %v226, %v295
        %v297 = vlaneseq
        %v298 = vshrl.u32 %v297, 7
        %v299 = vsub.s32 7, %v298
        %v300 = vrot.slane %v226, %v299
        %v301 = vlaneseq
        %v302 = vshrl.u32 %v301, 7
        %v303 = vsub.s32 0, %v302
        %v304 = vrot.slane %v229, %v303
        %v305 = vlaneseq
        %v306 = vshrl.u32 %v305, 7
        %v307 = vsub.s32 1, %v306
        %v308 = vrot.slane %v229, %v307
        %v309 = vlaneseq
        %v310 = vshrl.u32 %v309, 7
        %v311 = vsub.s32 2, %v310
        %v312 = vrot.slane %v229, %v311
        %v313 = vlaneseq
        %v314 = vshrl.u32 %v313, 7
        %v315 = vsub.s32 3, %v314
        %v316 = vrot.slane %v229, %v315
        %v317 = vlaneseq
        %v318 = vshrl.u32 %v317, 7
        %v319 = vsub.s32 4, %v318
        %v320 = vrot.slane %v229, %v319
        %v321 = vlaneseq
        %v322 = vshrl.u32 %v321, 7
        %v323 = vsub.s32 5, %v322
        %v324 = vrot.slane %v229, %v323
        %v325 = vlaneseq
        %v326 = vshrl.u32 %v325, 7
        %v327 = vsub.s32 6, %v326
        %v328 = vrot.slane %v229, %v327
        %v329 = vlaneseq
        %v330 = vshrl.u32 %v329, 7
        %v331 = vsub.s32 7, %v330
        %v332 = vrot.slane %v229, %v331
        %v333 = vlaneseq
        %v334 = vshrl.u32 %v333, 7
        %v335 = vsub.s32 0, %v334
        %v336 = vrot.slane %v232, %v335
        %v337 = vlaneseq
        %v338 = vshrl.u32 %v337, 7
        %v339 = vsub.s32 1, %v338
        %v340 = vrot.slane %v232, %v339
        %v341 = vlaneseq
        %v342 = vshrl.u32 %v341, 7
        %v343 = vsub.s32 2, %v342
        %v344 = vrot.slane %v232, %v343
        %v345 = vlaneseq
        %v346 = vshrl.u32 %v345, 7
        %v347 = vsub.s32 3, %v346
        %v348 = vrot.slane %v232, %v347
        %v349 = vlaneseq
        %v350 = vshrl.u32 %v349, 7
        %v351 = vsub.s32 4, %v350
        %v352 = vrot.slane %v232, %v351
        %v353 = vlaneseq
        %v354 = vshrl.u32 %v353, 7
        %v355 = vsub.s32 5, %v354
        %v356 = vrot.slane %v232, %v355
        %v357 = vlaneseq
        %v358 = vshrl.u32 %v357, 7
        %v359 = vsub.s32 6, %v358
        %v360 = vrot.slane %v232, %v359
        %v361 = vlaneseq
        %v362 = vshrl.u32 %v361, 7
        %v363 = vsub.s32 7, %v362
        %v364 = vrot.slane %v232, %v363
        %v365 = vcombine.low %v240, %v244
        %v366 = vcombine.low %v248, %v252
        %v367 = vcombine.low %v256, %v260
        %v368 = vcombine.low %v264, %v268
        %v370 = vunpack.c.l.s4 1966171168
        %v371 = vunpack.c.0.s8 %v370
        %v372 = vlaneseq
        %v373 = vshrl.u32 %v372, 7
        %v374 = vsub.s32 %v371, %v373
        %v375 = vrot.slane %v365, %v374
        %v377 = vunpack.c.l.s4 1966171168
        %v378 = vunpack.c.0.s8 %v377
        %v379 = vlaneseq
        %v380 = vshrl.u32 %v379, 7
        %v381 = vsub.s32 %v378, %v380
        %v382 = vrot.slane %v366, %v381
        %v384 = vunpack.c.l.s4 1966171168
        %v385 = vunpack.c.0.s8 %v384
        %v386 = vlaneseq
        %v387 = vshrl.u32 %v386, 7
        %v388 = vsub.s32 %v385, %v387
        %v389 = vrot.slane %v367, %v388
        %v391 = vunpack.c.l.s4 1966171168
        %v392 = vunpack.c.0.s8 %v391
        %v393 = vlaneseq
        %v394 = vshrl.u32 %v393, 7
        %v395 = vsub.s32 %v392, %v394
        %v396 = vrot.slane %v368, %v395
        %v397 = vcombine.low %v375, %v382
        %v398 = vcombine.low %v389, %v396
        %v400 = vunpack.c.l.s4 1966171168
        %v401 = vunpack.c.0.s8 %v400
        %v402 = vlaneseq
        %v403 = vshrl.u32 %v402, 7
        %v404 = vsub.s32 %v401, %v403
        %v405 = vrot.slane %v397, %v404
        %v407 = vunpack.c.l.s4 1966171168
        %v408 = vunpack.c.0.s8 %v407
        %v409 = vlaneseq
        %v410 = vshrl.u32 %v409, 7
        %v411 = vsub.s32 %v408, %v410
        %v412 = vrot.slane %v398, %v411
        %v413 = vcombine.low %v405, %v412
        %v414 = vcombine.low %v272, %v276
        %v415 = vcombine.low %v280, %v284
        %v416 = vcombine.low %v288, %v292
        %v417 = vcombine.low %v296, %v300
        %v419 = vunpack.c.l.s4 1966171168
        %v420 = vunpack.c.0.s8 %v419
        %v421 = vlaneseq
        %v422 = vshrl.u32 %v421, 7
        %v423 = vsub.s32 %v420, %v422
        %v424 = vrot.slane %v414, %v423
        %v426 = vunpack.c.l.s4 1966171168
        %v427 = vunpack.c.0.s8 %v426
        %v428 = vlaneseq
        %v429 = vshrl.u32 %v428, 7
        %v430 = vsub.s32 %v427, %v429
        %v431 = vrot.slane %v415, %v430
        %v433 = vunpack.c.l.s4 1966171168
        %v434 = vunpack.c.0.s8 %v433
        %v435 = vlaneseq
        %v436 = vshrl.u32 %v435, 7
        %v437 = vsub.s32 %v434, %v436
        %v438 = vrot.slane %v416, %v437
        %v440 = vunpack.c.l.s4 1966171168
        %v441 = vunpack.c.0.s8 %v440
        %v442 = vlaneseq
        %v443 = vshrl.u32 %v442, 7
        %v444 = vsub.s32 %v441, %v443
        %v445 = vrot.slane %v417, %v444
        %v446 = vcombine.low %v424, %v431
        %v447 = vcombine.low %v438, %v445
        %v449 = vunpack.c.l.s4 1966171168
        %v450 = vunpack.c.0.s8 %v449
        %v451 = vlaneseq
        %v452 = vshrl.u32 %v451, 7
        %v453 = vsub.s32 %v450, %v452
        %v454 = vrot.slane %v446, %v453
        %v456 = vunpack.c.l.s4 1966171168
        %v457 = vunpack.c.0.s8 %v456
        %v458 = vlaneseq
        %v459 = vshrl.u32 %v458, 7
        %v460 = vsub.s32 %v457, %v459
        %v461 = vrot.slane %v447, %v460
        %v462 = vcombine.low %v454, %v461
        %v463 = vcombine.low %v304, %v308
        %v464 = vcombine.low %v312, %v316
        %v465 = vcombine.low %v320, %v324
        %v466 = vcombine.low %v328, %v332
        %v468 = vunpack.c.l.s4 1966171168
        %v469 = vunpack.c.0.s8 %v468
        %v470 = vlaneseq
        %v471 = vshrl.u32 %v470, 7
        %v472 = vsub.s32 %v469, %v471
        %v473 = vrot.slane %v463, %v472
        %v475 = vunpack.c.l.s4 1966171168
        %v476 = vunpack.c.0.s8 %v475
        %v477 = vlaneseq
        %v478 = vshrl.u32 %v477, 7
        %v479 = vsub.s32 %v476, %v478
        %v480 = vrot.slane %v464, %v479
        %v482 = vunpack.c.l.s4 1966171168
        %v483 = vunpack.c.0.s8 %v482
        %v484 = vlaneseq
        %v485 = vshrl.u32 %v484, 7
        %v486 = vsub.s32 %v483, %v485
        %v487 = vrot.slane %v465, %v486
        %v489 = vunpack.c.l.s4 1966171168
        %v490 = vunpack.c.0.s8 %v489
        %v491 = vlaneseq
        %v492 = vshrl.u32 %v491, 7
        %v493 = vsub.s32 %v490, %v492
        %v494 = vrot.slane %v466, %v493
        %v495 = vcombine.low %v473, %v480
        %v496 = vcombine.low %v487, %v494
        %v498 = vunpack.c.l.s4 1966171168
        %v499 = vunpack.c.0.s8 %v498
        %v500 = vlaneseq
        %v501 = vshrl.u32 %v500, 7
        %v502 = vsub.s32 %v499, %v501
        %v503 = vrot.slane %v495, %v502
        %v505 = vunpack.c.l.s4 1966171168
        %v506 = vunpack.c.0.s8 %v505
        %v507 = vlaneseq
        %v508 = vshrl.u32 %v507, 7
        %v509 = vsub.s32 %v506, %v508
        %v510 = vrot.slane %v496, %v509
        %v511 = vcombine.low %v503, %v510
        %v512 = vcombine.low %v336, %v340
        %v513 = vcombine.low %v344, %v348
        %v514 = vcombine.low %v352, %v356
        %v515 = vcombine.low %v360, %v364
        %v517 = vunpack.c.l.s4 1966171168
        %v518 = vunpack.c.0.s8 %v517
        %v519 = vlaneseq
        %v520 = vshrl.u32 %v519, 7
        %v521 = vsub.s32 %v518, %v520
        %v522 = vrot.slane %v512, %v521
        %v524 = vunpack.c.l.s4 1966171168
        %v525 = vunpack.c.0.s8 %v524
        %v526 = vlaneseq
        %v527 = vshrl.u32 %v526, 7
        %v528 = vsub.s32 %v525, %v527
        %v529 = vrot.slane %v513, %v528
        %v531 = vunpack.c.l.s4 1966171168
        %v532 = vunpack.c.0.s8 %v531
        %v533 = vlaneseq
        %v534 = vshrl.u32 %v533, 7
        %v535 = vsub.s32 %v532, %v534
        %v536 = vrot.slane %v514, %v535
        %v538 = vunpack.c.l.s4 1966171168
        %v539 = vunpack.c.0.s8 %v538
        %v540 = vlaneseq
        %v541 = vshrl.u32 %v540, 7
        %v542 = vsub.s32 %v539, %v541
        %v543 = vrot.slane %v515, %v542
        %v544 = vcombine.low %v522, %v529
        %v545 = vcombine.low %v536, %v543
        %v547 = vunpack.c.l.s4 1966171168
        %v548 = vunpack.c.0.s8 %v547
        %v549 = vlaneseq
        %v550 = vshrl.u32 %v549, 7
        %v551 = vsub.s32 %v548, %v550
        %v552 = vrot.slane %v544, %v551
        %v554 = vunpack.c.l.s4 1966171168
        %v555 = vunpack.c.0.s8 %v554
        %v556 = vlaneseq
        %v557 = vshrl.u32 %v556, 7
        %v558 = vsub.s32 %v555, %v557
        %v559 = vrot.slane %v545, %v558
        %v560 = vcombine.low %v552, %v559
        %561 = vset.pattern.permute.xlu0 0
        %562 = vperm.xlu0 %561, %v413
        %v563 = vpop.permute.xlu0 %562
        %564 = vset.pattern.permute.xlu0 0
        %565 = vperm.xlu0 %564, %v462
        %v566 = vpop.permute.xlu0 %565
        %567 = vset.pattern.permute.xlu0 0
        %568 = vperm.xlu0 %567, %v511
        %v569 = vpop.permute.xlu0 %568
        %570 = vset.pattern.permute.xlu0 0
        %571 = vperm.xlu0 %570, %v560
        %v572 = vpop.permute.xlu0 %571
        %v573 = vlaneseq
        %v574 = vand.u32 %v573, 127
        %v575 = vlaneseq
        %v576 = vshrl.u32 %v575, 7
        %v577 = vsub.s32 %v574, %v576
        %v578 = vrot.slane %v563, %v577
        %v579 = vadd.s32 %v574, 4294967288
        %v580 = vlaneseq
        %v581 = vshrl.u32 %v580, 7
        %v582 = vsub.s32 %v579, %v581
        %v583 = vrot.slane %v566, %v582
        %vm584 = vcmask 130112
        %v585 = vsel %vm584, %v583, %v578
        %v586 = vadd.s32 %v574, 4294967280
        %v587 = vlaneseq
        %v588 = vshrl.u32 %v587, 7
        %v589 = vsub.s32 %v586, %v588
        %v590 = vrot.slane %v569, %v589
        %vm591 = vcmask 195712
        %v592 = vsel %vm591, %v590, %v585
        %v593 = vadd.s32 %v574, 4294967272
        %v594 = vlaneseq
        %v595 = vshrl.u32 %v594, 7
        %v596 = vsub.s32 %v593, %v595
        %v597 = vrot.slane %v572, %v596
        %vm598 = vcmask 261312
        %v599 = vsel %vm598, %v597, %v592
        %v601 = vunpack.c.l.s4 1966171168
        %v602 = vunpack.c.0.s8 %v601
        %v603 = vlaneseq
        %v604 = vshrl.u32 %v603, 7
        %v605 = vsub.s32 %v602, %v604
        %v606 = vrot.slane %v599, %v605
        %v608 = vunpack.c.l.s4 1966171168
        %v609 = vunpack.c.0.s8 %v608
        %v610 = vlaneseq
        %v611 = vshrl.u32 %v610, 7
        %v612 = vsub.s32 %v609, %v611
        %v613 = vrot.slane %v606, %v612
        %v615 = vadd.f32 %v220, %v613
        %vm616 = vcmask 253952
        %617 = vst.msk [vmem:[#allocation2] sm:$0x1] %vm616, %v615
        %v618 = vld [vmem:[#allocation3] sm:$0x1]
        %v619 = vmax.f32 %v212, %v213
        %620 = vmax.xlane.f32.xlu0 %v619
        %v621 = vpop.xlane.xlu0 %620
        %v622 = vmax.f32 %v214, %v215
        %623 = vmax.xlane.f32.xlu0 %v622
        %v624 = vpop.xlane.xlu0 %623
        %v625 = vmax.f32 %v216, %v217
        %626 = vmax.xlane.f32.xlu0 %v625
        %v627 = vpop.xlane.xlu0 %626
        %v628 = vmax.f32 %v218, %v219
        %629 = vmax.xlane.f32.xlu0 %v628
        %v630 = vpop.xlane.xlu0 %629
        %v635 = vlaneseq
        %v636 = vshrl.u32 %v635, 7
        %v637 = vsub.s32 0, %v636
        %v638 = vrot.slane %v621, %v637
        %v639 = vlaneseq
        %v640 = vshrl.u32 %v639, 7
        %v641 = vsub.s32 1, %v640
        %v642 = vrot.slane %v621, %v641
        %v643 = vlaneseq
        %v644 = vshrl.u32 %v643, 7
        %v645 = vsub.s32 2, %v644
        %v646 = vrot.slane %v621, %v645
        %v647 = vlaneseq
        %v648 = vshrl.u32 %v647, 7
        %v649 = vsub.s32 3, %v648
        %v650 = vrot.slane %v621, %v649
        %v651 = vlaneseq
        %v652 = vshrl.u32 %v651, 7
        %v653 = vsub.s32 4, %v652
        %v654 = vrot.slane %v621, %v653
        %v655 = vlaneseq
        %v656 = vshrl.u32 %v655, 7
        %v657 = vsub.s32 5, %v656
        %v658 = vrot.slane %v621, %v657
        %v659 = vlaneseq
        %v660 = vshrl.u32 %v659, 7
        %v661 = vsub.s32 6, %v660
        %v662 = vrot.slane %v621, %v661
        %v663 = vlaneseq
        %v664 = vshrl.u32 %v663, 7
        %v665 = vsub.s32 7, %v664
        %v666 = vrot.slane %v621, %v665
        %v667 = vlaneseq
        %v668 = vshrl.u32 %v667, 7
        %v669 = vsub.s32 0, %v668
        %v670 = vrot.slane %v624, %v669
        %v671 = vlaneseq
        %v672 = vshrl.u32 %v671, 7
        %v673 = vsub.s32 1, %v672
        %v674 = vrot.slane %v624, %v673
        %v675 = vlaneseq
        %v676 = vshrl.u32 %v675, 7
        %v677 = vsub.s32 2, %v676
        %v678 = vrot.slane %v624, %v677
        %v679 = vlaneseq
        %v680 = vshrl.u32 %v679, 7
        %v681 = vsub.s32 3, %v680
        %v682 = vrot.slane %v624, %v681
        %v683 = vlaneseq
        %v684 = vshrl.u32 %v683, 7
        %v685 = vsub.s32 4, %v684
        %v686 = vrot.slane %v624, %v685
        %v687 = vlaneseq
        %v688 = vshrl.u32 %v687, 7
        %v689 = vsub.s32 5, %v688
        %v690 = vrot.slane %v624, %v689
        %v691 = vlaneseq
        %v692 = vshrl.u32 %v691, 7
        %v693 = vsub.s32 6, %v692
        %v694 = vrot.slane %v624, %v693
        %v695 = vlaneseq
        %v696 = vshrl.u32 %v695, 7
        %v697 = vsub.s32 7, %v696
        %v698 = vrot.slane %v624, %v697
        %v699 = vlaneseq
        %v700 = vshrl.u32 %v699, 7
        %v701 = vsub.s32 0, %v700
        %v702 = vrot.slane %v627, %v701
        %v703 = vlaneseq
        %v704 = vshrl.u32 %v703, 7
        %v705 = vsub.s32 1, %v704
        %v706 = vrot.slane %v627, %v705
        %v707 = vlaneseq
        %v708 = vshrl.u32 %v707, 7
        %v709 = vsub.s32 2, %v708
        %v710 = vrot.slane %v627, %v709
        %v711 = vlaneseq
        %v712 = vshrl.u32 %v711, 7
        %v713 = vsub.s32 3, %v712
        %v714 = vrot.slane %v627, %v713
        %v715 = vlaneseq
        %v716 = vshrl.u32 %v715, 7
        %v717 = vsub.s32 4, %v716
        %v718 = vrot.slane %v627, %v717
        %v719 = vlaneseq
        %v720 = vshrl.u32 %v719, 7
        %v721 = vsub.s32 5, %v720
        %v722 = vrot.slane %v627, %v721
        %v723 = vlaneseq
        %v724 = vshrl.u32 %v723, 7
        %v725 = vsub.s32 6, %v724
        %v726 = vrot.slane %v627, %v725
        %v727 = vlaneseq
        %v728 = vshrl.u32 %v727, 7
        %v729 = vsub.s32 7, %v728
        %v730 = vrot.slane %v627, %v729
        %v731 = vlaneseq
        %v732 = vshrl.u32 %v731, 7
        %v733 = vsub.s32 0, %v732
        %v734 = vrot.slane %v630, %v733
        %v735 = vlaneseq
        %v736 = vshrl.u32 %v735, 7
        %v737 = vsub.s32 1, %v736
        %v738 = vrot.slane %v630, %v737
        %v739 = vlaneseq
        %v740 = vshrl.u32 %v739, 7
        %v741 = vsub.s32 2, %v740
        %v742 = vrot.slane %v630, %v741
        %v743 = vlaneseq
        %v744 = vshrl.u32 %v743, 7
        %v745 = vsub.s32 3, %v744
        %v746 = vrot.slane %v630, %v745
        %v747 = vlaneseq
        %v748 = vshrl.u32 %v747, 7
        %v749 = vsub.s32 4, %v748
        %v750 = vrot.slane %v630, %v749
        %v751 = vlaneseq
        %v752 = vshrl.u32 %v751, 7
        %v753 = vsub.s32 5, %v752
        %v754 = vrot.slane %v630, %v753
        %v755 = vlaneseq
        %v756 = vshrl.u32 %v755, 7
        %v757 = vsub.s32 6, %v756
        %v758 = vrot.slane %v630, %v757
        %v759 = vlaneseq
        %v760 = vshrl.u32 %v759, 7
        %v761 = vsub.s32 7, %v760
        %v762 = vrot.slane %v630, %v761
        %v763 = vcombine.low %v638, %v642
        %v764 = vcombine.low %v646, %v650
        %v765 = vcombine.low %v654, %v658
        %v766 = vcombine.low %v662, %v666
        %v768 = vunpack.c.l.s4 1966171168
        %v769 = vunpack.c.0.s8 %v768
        %v770 = vlaneseq
        %v771 = vshrl.u32 %v770, 7
        %v772 = vsub.s32 %v769, %v771
        %v773 = vrot.slane %v763, %v772
        %v775 = vunpack.c.l.s4 1966171168
        %v776 = vunpack.c.0.s8 %v775
        %v777 = vlaneseq
        %v778 = vshrl.u32 %v777, 7
        %v779 = vsub.s32 %v776, %v778
        %v780 = vrot.slane %v764, %v779
        %v782 = vunpack.c.l.s4 1966171168
        %v783 = vunpack.c.0.s8 %v782
        %v784 = vlaneseq
        %v785 = vshrl.u32 %v784, 7
        %v786 = vsub.s32 %v783, %v785
        %v787 = vrot.slane %v765, %v786
        %v789 = vunpack.c.l.s4 1966171168
        %v790 = vunpack.c.0.s8 %v789
        %v791 = vlaneseq
        %v792 = vshrl.u32 %v791, 7
        %v793 = vsub.s32 %v790, %v792
        %v794 = vrot.slane %v766, %v793
        %v795 = vcombine.low %v773, %v780
        %v796 = vcombine.low %v787, %v794
        %v798 = vunpack.c.l.s4 1966171168
        %v799 = vunpack.c.0.s8 %v798
        %v800 = vlaneseq
        %v801 = vshrl.u32 %v800, 7
        %v802 = vsub.s32 %v799, %v801
        %v803 = vrot.slane %v795, %v802
        %v805 = vunpack.c.l.s4 1966171168
        %v806 = vunpack.c.0.s8 %v805
        %v807 = vlaneseq
        %v808 = vshrl.u32 %v807, 7
        %v809 = vsub.s32 %v806, %v808
        %v810 = vrot.slane %v796, %v809
        %v811 = vcombine.low %v803, %v810
        %v812 = vcombine.low %v670, %v674
        %v813 = vcombine.low %v678, %v682
        %v814 = vcombine.low %v686, %v690
        %v815 = vcombine.low %v694, %v698
        %v817 = vunpack.c.l.s4 1966171168
        %v818 = vunpack.c.0.s8 %v817
        %v819 = vlaneseq
        %v820 = vshrl.u32 %v819, 7
        %v821 = vsub.s32 %v818, %v820
        %v822 = vrot.slane %v812, %v821
        %v824 = vunpack.c.l.s4 1966171168
        %v825 = vunpack.c.0.s8 %v824
        %v826 = vlaneseq
        %v827 = vshrl.u32 %v826, 7
        %v828 = vsub.s32 %v825, %v827
        %v829 = vrot.slane %v813, %v828
        %v831 = vunpack.c.l.s4 1966171168
        %v832 = vunpack.c.0.s8 %v831
        %v833 = vlaneseq
        %v834 = vshrl.u32 %v833, 7
        %v835 = vsub.s32 %v832, %v834
        %v836 = vrot.slane %v814, %v835
        %v838 = vunpack.c.l.s4 1966171168
        %v839 = vunpack.c.0.s8 %v838
        %v840 = vlaneseq
        %v841 = vshrl.u32 %v840, 7
        %v842 = vsub.s32 %v839, %v841
        %v843 = vrot.slane %v815, %v842
        %v844 = vcombine.low %v822, %v829
        %v845 = vcombine.low %v836, %v843
        %v847 = vunpack.c.l.s4 1966171168
        %v848 = vunpack.c.0.s8 %v847
        %v849 = vlaneseq
        %v850 = vshrl.u32 %v849, 7
        %v851 = vsub.s32 %v848, %v850
        %v852 = vrot.slane %v844, %v851
        %v854 = vunpack.c.l.s4 1966171168
        %v855 = vunpack.c.0.s8 %v854
        %v856 = vlaneseq
        %v857 = vshrl.u32 %v856, 7
        %v858 = vsub.s32 %v855, %v857
        %v859 = vrot.slane %v845, %v858
        %v860 = vcombine.low %v852, %v859
        %v861 = vcombine.low %v702, %v706
        %v862 = vcombine.low %v710, %v714
        %v863 = vcombine.low %v718, %v722
        %v864 = vcombine.low %v726, %v730
        %v866 = vunpack.c.l.s4 1966171168
        %v867 = vunpack.c.0.s8 %v866
        %v868 = vlaneseq
        %v869 = vshrl.u32 %v868, 7
        %v870 = vsub.s32 %v867, %v869
        %v871 = vrot.slane %v861, %v870
        %v873 = vunpack.c.l.s4 1966171168
        %v874 = vunpack.c.0.s8 %v873
        %v875 = vlaneseq
        %v876 = vshrl.u32 %v875, 7
        %v877 = vsub.s32 %v874, %v876
        %v878 = vrot.slane %v862, %v877
        %v880 = vunpack.c.l.s4 1966171168
        %v881 = vunpack.c.0.s8 %v880
        %v882 = vlaneseq
        %v883 = vshrl.u32 %v882, 7
        %v884 = vsub.s32 %v881, %v883
        %v885 = vrot.slane %v863, %v884
        %v887 = vunpack.c.l.s4 1966171168
        %v888 = vunpack.c.0.s8 %v887
        %v889 = vlaneseq
        %v890 = vshrl.u32 %v889, 7
        %v891 = vsub.s32 %v888, %v890
        %v892 = vrot.slane %v864, %v891
        %v893 = vcombine.low %v871, %v878
        %v894 = vcombine.low %v885, %v892
        %v896 = vunpack.c.l.s4 1966171168
        %v897 = vunpack.c.0.s8 %v896
        %v898 = vlaneseq
        %v899 = vshrl.u32 %v898, 7
        %v900 = vsub.s32 %v897, %v899
        %v901 = vrot.slane %v893, %v900
        %v903 = vunpack.c.l.s4 1966171168
        %v904 = vunpack.c.0.s8 %v903
        %v905 = vlaneseq
        %v906 = vshrl.u32 %v905, 7
        %v907 = vsub.s32 %v904, %v906
        %v908 = vrot.slane %v894, %v907
        %v909 = vcombine.low %v901, %v908
        %v910 = vcombine.low %v734, %v738
        %v911 = vcombine.low %v742, %v746
        %v912 = vcombine.low %v750, %v754
        %v913 = vcombine.low %v758, %v762
        %v915 = vunpack.c.l.s4 1966171168
        %v916 = vunpack.c.0.s8 %v915
        %v917 = vlaneseq
        %v918 = vshrl.u32 %v917, 7
        %v919 = vsub.s32 %v916, %v918
        %v920 = vrot.slane %v910, %v919
        %v922 = vunpack.c.l.s4 1966171168
        %v923 = vunpack.c.0.s8 %v922
        %v924 = vlaneseq
        %v925 = vshrl.u32 %v924, 7
        %v926 = vsub.s32 %v923, %v925
        %v927 = vrot.slane %v911, %v926
        %v929 = vunpack.c.l.s4 1966171168
        %v930 = vunpack.c.0.s8 %v929
        %v931 = vlaneseq
        %v932 = vshrl.u32 %v931, 7
        %v933 = vsub.s32 %v930, %v932
        %v934 = vrot.slane %v912, %v933
        %v936 = vunpack.c.l.s4 1966171168
        %v937 = vunpack.c.0.s8 %v936
        %v938 = vlaneseq
        %v939 = vshrl.u32 %v938, 7
        %v940 = vsub.s32 %v937, %v939
        %v941 = vrot.slane %v913, %v940
        %v942 = vcombine.low %v920, %v927
        %v943 = vcombine.low %v934, %v941
        %v945 = vunpack.c.l.s4 1966171168
        %v946 = vunpack.c.0.s8 %v945
        %v947 = vlaneseq
        %v948 = vshrl.u32 %v947, 7
        %v949 = vsub.s32 %v946, %v948
        %v950 = vrot.slane %v942, %v949
        %v952 = vunpack.c.l.s4 1966171168
        %v953 = vunpack.c.0.s8 %v952
        %v954 = vlaneseq
        %v955 = vshrl.u32 %v954, 7
        %v956 = vsub.s32 %v953, %v955
        %v957 = vrot.slane %v943, %v956
        %v958 = vcombine.low %v950, %v957
        %959 = vset.pattern.permute.xlu0 0
        %960 = vperm.xlu0 %959, %v811
        %v961 = vpop.permute.xlu0 %960
        %962 = vset.pattern.permute.xlu0 0
        %963 = vperm.xlu0 %962, %v860
        %v964 = vpop.permute.xlu0 %963
        %965 = vset.pattern.permute.xlu0 0
        %966 = vperm.xlu0 %965, %v909
        %v967 = vpop.permute.xlu0 %966
        %968 = vset.pattern.permute.xlu0 0
        %969 = vperm.xlu0 %968, %v958
        %v970 = vpop.permute.xlu0 %969
        %v971 = vlaneseq
        %v972 = vshrl.u32 %v971, 7
        %v973 = vsub.s32 %v574, %v972
        %v974 = vrot.slane %v961, %v973
        %v975 = vlaneseq
        %v976 = vshrl.u32 %v975, 7
        %v977 = vsub.s32 %v579, %v976
        %v978 = vrot.slane %v964, %v977
        %v979 = vsel %vm584, %v978, %v974
        %v980 = vlaneseq
        %v981 = vshrl.u32 %v980, 7
        %v982 = vsub.s32 %v586, %v981
        %v983 = vrot.slane %v967, %v982
        %v984 = vsel %vm591, %v983, %v979
        %v985 = vlaneseq
        %v986 = vshrl.u32 %v985, 7
        %v987 = vsub.s32 %v593, %v986
        %v988 = vrot.slane %v970, %v987
        %v989 = vsel %vm598, %v988, %v984
        %v991 = vunpack.c.l.s4 1966171168
        %v992 = vunpack.c.0.s8 %v991
        %v993 = vlaneseq
        %v994 = vshrl.u32 %v993, 7
        %v995 = vsub.s32 %v992, %v994
        %v996 = vrot.slane %v989, %v995
        %v998 = vunpack.c.l.s4 1966171168
        %v999 = vunpack.c.0.s8 %v998
        %v1000 = vlaneseq
        %v1001 = vshrl.u32 %v1000, 7
        %v1002 = vsub.s32 %v999, %v1001
        %v1003 = vrot.slane %v996, %v1002
        %v1005 = vmax.f32 %v618, %v1003
        %1006 = vst.msk [vmem:[#allocation3] sm:$0x1] %vm616, %v1005
        // Predicated region
        $region41: #{tpu_custom_call.1} parent=31 // pred_check
          %p1007 = pneg %p205
        $region42: #{tpu_custom_call.1} parent=31 // pred_check_branch
          %1009 = sbr.rel (%p1007) target = $region44
        $region43: #{tpu_custom_call.1} parent=31 // pred_region
          %v1010 = vld [vmem:[#allocation2] sm:$0x1]
          %v1011 = vmul.f32 %v1010, 0.00390625
          %v1012 = vld [vmem:[#allocation3] sm:$0x1]
          %v1013 = vld [vmem:[%s1] sm:$0xff]
          %v1014 = vld [vmem:[%s1 + $0x8] sm:$0xff]
          %v1015 = vld [vmem:[%s1 + $0x10] sm:$0xff]
          %v1016 = vld [vmem:[%s1 + $0x18] sm:$0xff]
          %v1017 = vld [vmem:[%s2] sm:$0x3]
          %v1019 = vlaneseq
          %v1020 = vshrl.u32 %v1019, 7
          %v1021 = vsub.s32 0, %v1020
          %v1022 = vrot.slane %v1012, %v1021
          %vm1024 = vcmask 1040384
          %v1025 = vsel %vm1024, %v1011, %v1022
          %vm1026 = vcmask 261120
          %v1028 = vsel %vm1026, %v1025, 0
          %1030 = vmatprep.subr.mxu0 0.0
          %1031 = vmatpush1.msra.mxu0 %v1013
          %1032 = vmatprep.subr.mxu0 0.0
          %1033 = vmatpush1.msra.mxu0 %v1014
          %1034 = vmatprep.subr.mxu0 0.0
          %1035 = vmatpush1.msra.mxu0 %v1015
          %1036 = vmatprep.subr.mxu0 0.0
          %1037 = vmatpush1.msra.mxu0 %v1016
          %1038 = vmatprep.subr.mxu0 0.0
          %1039 = vmatpush1.msra.mxu0 0.0
          %1040 = vmatprep.subr.mxu0 0.0
          %1041 = vmatpush1.msra.mxu0 0.0
          %1042 = vmatprep.subr.mxu0 0.0
          %1043 = vmatpush1.msra.mxu0 0.0
          %1044 = vmatprep.subr.mxu0 0.0
          %1045 = vmatpush1.msra.mxu0 0.0
          %1046 = vmatprep.subr.mxu0 0.0
          %1047 = vmatpush1.msra.mxu0 0.0
          %1048 = vmatprep.subr.mxu0 0.0
          %1049 = vmatpush1.msra.mxu0 0.0
          %1050 = vmatprep.subr.mxu0 0.0
          %1051 = vmatpush1.msra.mxu0 0.0
          %1052 = vmatprep.subr.mxu0 0.0
          %1053 = vmatpush1.msra.mxu0 0.0
          %1054 = vmatprep.subr.mxu0 0.0
          %1055 = vmatpush1.msra.mxu0 0.0
          %1056 = vmatprep.subr.mxu0 0.0
          %1057 = vmatpush1.msra.mxu0 0.0
          %1058 = vmatprep.subr.mxu0 0.0
          %1059 = vmatpush1.msra.mxu0 0.0
          %1060 = vmatprep.subr.mxu0 0.0
          %1061 = vmatpush1.msra.mxu0 0.0
          %1062 = vmatprep.subr.mxu0 0.0
          %1063 = vmatpush1.msra.mxu0 0.0
          %1064 = vmatprep.subr.mxu0 0.0
          %1065 = vmatpush1.msra.mxu0 0.0
          %1066 = vmatprep.subr.mxu0 0.0
          %1067 = vmatpush1.msra.mxu0 0.0
          %1068 = vmatprep.subr.mxu0 0.0
          %1069 = vmatpush1.msra.mxu0 0.0
          %1070 = vmatprep.subr.mxu0 0.0
          %1071 = vmatpush1.msra.mxu0 0.0
          %1072 = vmatprep.subr.mxu0 0.0
          %1073 = vmatpush1.msra.mxu0 0.0
          %1074 = vmatprep.subr.mxu0 0.0
          %1075 = vmatpush1.msra.mxu0 0.0
          %1076 = vmatprep.subr.mxu0 0.0
          %1077 = vmatpush1.msra.mxu0 0.0
          %1078 = vmatprep.subr.mxu0 0.0
          %1079 = vmatpush1.msra.mxu0 0.0
          %1080 = vmatprep.subr.mxu0 0.0
          %1081 = vmatpush1.msra.mxu0 0.0
          %1082 = vmatprep.subr.mxu0 0.0
          %1083 = vmatpush1.msra.mxu0 0.0
          %1084 = vmatprep.subr.mxu0 0.0
          %1085 = vmatpush1.msra.mxu0 0.0
          %1086 = vmatprep.subr.mxu0 0.0
          %1087 = vmatpush1.msra.mxu0 0.0
          %1088 = vmatprep.subr.mxu0 0.0
          %1089 = vmatpush1.msra.mxu0 0.0
          %1090 = vmatprep.subr.mxu0 0.0
          %1091 = vmatpush1.msra.mxu0 0.0
          %1092 = vmatprep.subr.mxu0 0.0
          %1093 = vmatpush1.msra.mxu0 0.0
          %1094 = vmatprep.mubr.f32.mxu0 0.0
          %1095 = vmatmul.mubr.f32.gmra.mrb[0].mxu0 %v1028
          %v1096 = vpop.f32.mrb[0].mxu0
          %v1097 = vadd.f32 0.0, %v1096
          %v1098 = vpop.f32.mrb[0].mxu0
          %1099 = vdwg.mxu0
          %v1100 = vmax.f32 %v1097, 0.0
          %vm1101 = vcmask 15360
          %v1103 = vsel %vm1101, %v1100, 0
          %vm1105 = vcmask 1041408
          %v1107 = vsel %vm1105, %v1017, 0
          %1109 = vmatprep.subr.mxu0 0.0
          %1110 = vmatpush1.msra.mxu0 %v1107
          %1111 = vmatprep.subr.mxu0 0.0
          %1112 = vmatpush1.msra.mxu0 0.0
          %1113 = vmatprep.subr.mxu0 0.0
          %1114 = vmatpush1.msra.mxu0 0.0
          %1115 = vmatprep.subr.mxu0 0.0
          %1116 = vmatpush1.msra.mxu0 0.0
          %1117 = vmatprep.subr.mxu0 0.0
          %1118 = vmatpush1.msra.mxu0 0.0
          %1119 = vmatprep.subr.mxu0 0.0
          %1120 = vmatpush1.msra.mxu0 0.0
          %1121 = vmatprep.subr.mxu0 0.0
          %1122 = vmatpush1.msra.mxu0 0.0
          %1123 = vmatprep.subr.mxu0 0.0
          %1124 = vmatpush1.msra.mxu0 0.0
          %1125 = vmatprep.subr.mxu0 0.0
          %1126 = vmatpush1.msra.mxu0 0.0
          %1127 = vmatprep.subr.mxu0 0.0
          %1128 = vmatpush1.msra.mxu0 0.0
          %1129 = vmatprep.subr.mxu0 0.0
          %1130 = vmatpush1.msra.mxu0 0.0
          %1131 = vmatprep.subr.mxu0 0.0
          %1132 = vmatpush1.msra.mxu0 0.0
          %1133 = vmatprep.subr.mxu0 0.0
          %1134 = vmatpush1.msra.mxu0 0.0
          %1135 = vmatprep.subr.mxu0 0.0
          %1136 = vmatpush1.msra.mxu0 0.0
          %1137 = vmatprep.subr.mxu0 0.0
          %1138 = vmatpush1.msra.mxu0 0.0
          %1139 = vmatprep.subr.mxu0 0.0
          %1140 = vmatpush1.msra.mxu0 0.0
          %1141 = vmatprep.subr.mxu0 0.0
          %1142 = vmatpush1.msra.mxu0 0.0
          %1143 = vmatprep.subr.mxu0 0.0
          %1144 = vmatpush1.msra.mxu0 0.0
          %1145 = vmatprep.subr.mxu0 0.0
          %1146 = vmatpush1.msra.mxu0 0.0
          %1147 = vmatprep.subr.mxu0 0.0
          %1148 = vmatpush1.msra.mxu0 0.0
          %1149 = vmatprep.subr.mxu0 0.0
          %1150 = vmatpush1.msra.mxu0 0.0
          %1151 = vmatprep.subr.mxu0 0.0
          %1152 = vmatpush1.msra.mxu0 0.0
          %1153 = vmatprep.subr.mxu0 0.0
          %1154 = vmatpush1.msra.mxu0 0.0
          %1155 = vmatprep.subr.mxu0 0.0
          %1156 = vmatpush1.msra.mxu0 0.0
          %1157 = vmatprep.subr.mxu0 0.0
          %1158 = vmatpush1.msra.mxu0 0.0
          %1159 = vmatprep.subr.mxu0 0.0
          %1160 = vmatpush1.msra.mxu0 0.0
          %1161 = vmatprep.subr.mxu0 0.0
          %1162 = vmatpush1.msra.mxu0 0.0
          %1163 = vmatprep.subr.mxu0 0.0
          %1164 = vmatpush1.msra.mxu0 0.0
          %1165 = vmatprep.subr.mxu0 0.0
          %1166 = vmatpush1.msra.mxu0 0.0
          %1167 = vmatprep.subr.mxu0 0.0
          %1168 = vmatpush1.msra.mxu0 0.0
          %1169 = vmatprep.subr.mxu0 0.0
          %1170 = vmatpush1.msra.mxu0 0.0
          %1171 = vmatprep.subr.mxu0 0.0
          %1172 = vmatpush1.msra.mxu0 0.0
          %1173 = vmatprep.mubr.f32.mxu0 0.0
          %1174 = vmatmul.mubr.f32.gmra.mrb[0].mxu0 %v1103
          %v1175 = vpop.f32.mrb[0].mxu0
          %v1176 = vadd.f32 0.0, %v1175
          %v1177 = vpop.f32.mrb[0].mxu0
          %1178 = vdwg.mxu0
          %v1180 = vrot.slane %v1176, 1
          %v1182 = vadd.f32 %v1176, %v1180
          %v1183 = vxor.u32 %v1182, 2147483648
          %v1184 = vmul.f32 %v1183, 1.442695
          %v1185 = vpow.pop %v1184
          %v1186 = vadd.f32 %v1185, 1.0
          %v1187 = vrcp.pop %v1186
          %v1188 = vmul.f32 1.0, %v1187
          %1189 = vst.msk [vmem:[%s203] sm:$0x1] %vm616, %v1188
        $region44: #{tpu_custom_call.1} parent=31 // pred_fallthru
          _
        %s1190 = sand.u32 %s110, 1
        %s1191 = scalar_lea.sflag [#allocation6], %s1190
        %s1192 = sand.u32 %s110, 1
        %s1193 = scalar_lea.vmem [#allocation7], %s1192
        // Predicated region
        $region45: #{tpu_custom_call.1} parent=31 // pred_check
          %p1194 = pneg %p120
        $region46: #{tpu_custom_call.1} parent=31 // pred_check_branch
          %1196 = sbr.rel (%p1194) target = $region48
        $region47: #{tpu_custom_call.1} parent=31 // pred_region
          %s1198 = ssub.s32 16, 16
          %1199 = vsyncadd %s1191, %s1198
          %s1200 = smul.addr %s24, 16
          %s1201 = scalar_lea.hbm %s3, %s1200
          %s1203 = sshll.u32 %s1193, 4
          %s1204 = int_to_ptr.vmem [resolvable:$true] %s1203
          %1206 = dma.vmem_to_hbm [thread:$0]  %s1204, 16, %s1201, %s1191
        $region48: #{tpu_custom_call.1} parent=31 // pred_fallthru
          _
      $region32: #{tpu_custom_call.1} parent=5 // pred_fallthru
        _
      %p1207 = scmp.le.s32.totalorder 2, %s15
      // Predicated region
      $region49: #{tpu_custom_call.1} parent=5 // pred_check
        %p1208 = pneg %p1207
      $region50: #{tpu_custom_call.1} parent=5 // pred_check_branch
        %1210 = sbr.rel (%p1208) target = $region52
      $region51: #{tpu_custom_call.1} parent=5 // pred_region
        %s1211 = ssub.s32 %s15, 2
        // Predicated region
        $region53: #{tpu_custom_call.1} parent=51 // pred_check
          %p1212 = pneg %p126
        $region54: #{tpu_custom_call.1} parent=51 // pred_check_branch
          %1214 = sbr.rel (%p1212) target = $region56
        $region55: #{tpu_custom_call.1} parent=51 // pred_region
          %s1215 = sand.u32 %s111, 1
          %s1216 = scalar_lea.sflag [#allocation6], %s1215
          %s1217 = sand.u32 %s111, 1
          %s1218 = scalar_lea.vmem [#allocation7], %s1217
          %1219 = dma.done %s1216, 16
        $region56: #{tpu_custom_call.1} parent=51 // pred_fallthru
          _
      $region52: #{tpu_custom_call.1} parent=5 // pred_fallthru
        _
    $region6: #{tpu_custom_call.1} parent=1 // loop_footer
      %s19 = sadd.s32 1, %s15
    $region7: #{tpu_custom_call.1} parent=1 // loop_footer_branch
      %14 = sbr.rel target = $region3
    $region8: #{tpu_custom_call.1} parent=1 // loop_exit
      _
    %1220 = vsyncpa [#allocation5], 1
    %s1221 = scalar_lea.sflag [#allocation5], 1
    %1222 = vsyncpa %s1221, 1
    %1223 = vsyncpa [#allocation6], 1
    %s1224 = scalar_lea.sflag [#allocation6], 1
    %1225 = vsyncpa %s1224, 1

</llo_original>
